<compile_context>
chip_gen: v5e
topology: v5e:2x2
jax: 0.10.0
libtpu: 0.0.40
codegen_flags: <defaults>
</compile_context>

<pallas_src>
import functools

import jax
import jax.numpy as jnp
import numpy as np
from jax.experimental import pallas as pl
from jax.experimental.pallas import tpu as pltpu


def _round_up(x: int, m: int) -> int:
    return ((x + m - 1) // m) * m


def _qfunc_kernel(x_ref, w1_ref, b1_ref, w2_ref, b2_ref, w3_ref, b3_ref, out_ref):
    # layer 1: Linear + ReLU   (bf16 feeds, f32 accumulation)
    h = jnp.dot(x_ref[...], w1_ref[...], preferred_element_type=jnp.float32)
    h = jnp.maximum(h + b1_ref[...], 0.0)
    # layer 2: Linear + ReLU
    h = jnp.dot(h.astype(w2_ref.dtype), w2_ref[...],
                preferred_element_type=jnp.float32)
    h = jnp.maximum(h + b2_ref[...], 0.0)
    # output layer: Linear (no activation), lane-dense padded output tile
    q = jnp.dot(h.astype(w3_ref.dtype), w3_ref[...],
                preferred_element_type=jnp.float32)
    out_ref[...] = (q + b3_ref[...]).astype(out_ref.dtype)


def fully_connected_q_forward(observations, params, *, block_b: int = 512,
                              compute_dtype=jnp.bfloat16):
    """observations: (B, obs_dim) f32.  Returns q-values of shape (B, action_dim),
    squeezed along -1 iff action_dim == 1 (matching torch.squeeze(dim=-1))."""
    w1, b1, w2, b2, w3, b3 = params
    B, obs_dim = observations.shape
    hidden = w1.shape[1]
    action_dim = w3.shape[1]

    # --- lane-dense final layer: pad output dim up to a multiple of 128 ------
    n_pad = max(128, _round_up(action_dim, 128))
    if n_pad != action_dim:
        w3p = jnp.zeros((hidden, n_pad), w3.dtype).at[:, :action_dim].set(w3)
        b3p = jnp.zeros((1, n_pad), b3.dtype).at[:, :action_dim].set(b3)
    else:
        w3p, b3p = w3, b3

    # --- batch tiling: tile of up to block_b rows (multiple of 8), pad B -----
    tb = min(_round_up(block_b, 8), _round_up(B, 8))
    b_pad = _round_up(B, tb)
    x = observations
    if b_pad != B:
        x = jnp.zeros((b_pad, obs_dim), x.dtype).at[:B].set(x)

    # --- bf16 MXU feeds; biases + accumulation stay f32 ----------------------
    x = x.astype(compute_dtype)
    w1c = w1.astype(compute_dtype)
    w2c = w2.astype(compute_dtype)
    w3c = w3p.astype(compute_dtype)
    b1c = b1.astype(jnp.float32)
    b2c = b2.astype(jnp.float32)
    b3c = b3p.astype(jnp.float32)

    grid = (b_pad // tb,)

    # Weights/biases use a constant block index -> fetched once, VMEM-resident.
    const2d = lambda shape: pl.BlockSpec(shape, lambda i: (0, 0))

    itemsize = jnp.dtype(compute_dtype).itemsize
    flops = 2 * b_pad * (obs_dim * hidden + hidden * hidden + hidden * n_pad)
    bytes_accessed = (
        x.size * itemsize
        + (w1c.size + w2c.size + w3c.size) * itemsize
        + (b1c.size + b2c.size + b3c.size) * 4
        + b_pad * n_pad * 4
    )

    q = pl.pallas_call(
        _qfunc_kernel,
        grid=grid,
        in_specs=[
            pl.BlockSpec((tb, obs_dim), lambda i: (i, 0)),
            const2d((obs_dim, hidden)),
            const2d((1, hidden)),
            const2d((hidden, hidden)),
            const2d((1, hidden)),
            const2d((hidden, n_pad)),
            const2d((1, n_pad)),
        ],
        out_specs=pl.BlockSpec((tb, n_pad), lambda i: (i, 0)),
        out_shape=jax.ShapeDtypeStruct((b_pad, n_pad), jnp.float32),
        compiler_params=pltpu.CompilerParams(
            dimension_semantics=("parallel",),
        ),
        cost_estimate=pl.CostEstimate(
            flops=flops, transcendentals=0, bytes_accessed=bytes_accessed),
    )(x, w1c, b1c, w2c, b2c, w3c, b3c)

    q = q[:B, :action_dim]
    if action_dim == 1:
        q = jnp.squeeze(q, axis=-1)
    return q


def init_params(key, observation_dim, hidden_dim, action_dim):
    """Deterministic synthetic init mirroring the module's __init__ shapes.

    Hidden Linear layers use the PyTorch default (kaiming-uniform-style bounds);
    the last layer uses xavier_uniform with gain=0.01 (orthogonal_init=False path).
    Weights are stored as (in_dim, out_dim).  Note: the last-layer bias is left
    at zero here (PyTorch leaves it at its default init); parity tests against a
    real torch checkpoint should load the torch bias directly."""
    k1, k2, k3, kb1, kb2 = jax.random.split(key, 5)

    def default_linear(kw, kb, fan_in, fan_out):
        bound = 1.0 / np.sqrt(fan_in)
        w = jax.random.uniform(kw, (fan_in, fan_out), jnp.float32, -bound, bound)
        b = jax.random.uniform(kb, (1, fan_out), jnp.float32, -bound, bound)
        return w, b

    def xavier_linear(kw, fan_in, fan_out, gain=0.01):
        bound = gain * np.sqrt(6.0 / (fan_in + fan_out))
        w = jax.random.uniform(kw, (fan_in, fan_out), jnp.float32, -bound, bound)
        b = jnp.zeros((1, fan_out), jnp.float32)
        return w, b

    w1, b1 = default_linear(k1, kb1, observation_dim, hidden_dim)
    w2, b2 = default_linear(k2, kb2, hidden_dim, hidden_dim)
    w3, b3 = xavier_linear(k3, hidden_dim, action_dim)
    return (w1, b1, w2, b2, w3, b3)


def reference_forward(observations, params, compute_dtype=jnp.bfloat16):
    """Pure-JAX reference mirroring the kernel's mixed-precision path."""
    w1, b1, w2, b2, w3, b3 = params
    x = observations.astype(compute_dtype)
    h = jnp.dot(x, w1.astype(compute_dtype),
                preferred_element_type=jnp.float32) + b1
    h = jnp.maximum(h, 0.0)
    h = jnp.dot(h.astype(compute_dtype), w2.astype(compute_dtype),
                preferred_element_type=jnp.float32) + b2
    h = jnp.maximum(h, 0.0)
    q = jnp.dot(h.astype(compute_dtype), w3.astype(compute_dtype),
                preferred_element_type=jnp.float32) + b3
    if q.shape[-1] == 1:
        q = jnp.squeeze(q, axis=-1)
    return q


if __name__ == "__main__":
    key = jax.random.PRNGKey(0)
    k_obs, k_params = jax.random.split(key)

    batch = 200           # non-multiple of the tile -> exercises batch padding
    observation_dim = 32
    hidden_dim = 256
    action_dim = 1        # Q-function head; squeeze(-1) then yields shape (batch,)
    block_b = 64          # small tile so the demo runs a multi-step parallel grid

    observations = jax.random.normal(k_obs, (batch, observation_dim), jnp.float32)
    params = init_params(k_params, observation_dim, hidden_dim, action_dim)

    fwd = functools.partial(fully_connected_q_forward, block_b=block_b)
    q = fwd(observations, params)
    q = jax.block_until_ready(q)

    q_ref = reference_forward(observations, params)
    np.testing.assert_allclose(np.asarray(q), np.asarray(q_ref),
                               rtol=1e-2, atol=1e-3)
    assert q.shape == (batch,), q.shape

    print("KERNEL_OK")
</pallas_src>

<mosaic_0001>
module attributes {stable_mosaic.version = 11 : i64} {
  func.func @_qfunc_kernel(%arg0: i32, %arg1: memref<64x32xbf16, #tpu.memory_space<vmem>>, %arg2: memref<32x256xbf16, #tpu.memory_space<vmem>>, %arg3: memref<1x256xf32, #tpu.memory_space<vmem>>, %arg4: memref<256x256xbf16, #tpu.memory_space<vmem>>, %arg5: memref<1x256xf32, #tpu.memory_space<vmem>>, %arg6: memref<256x128xbf16, #tpu.memory_space<vmem>>, %arg7: memref<1x128xf32, #tpu.memory_space<vmem>>, %arg8: memref<64x128xf32, #tpu.memory_space<vmem>>) attributes {dimension_semantics = [#tpu.dimension_semantics<parallel>], iteration_bounds = array<i64: 4>, scalar_prefetch = 0 : i64, scratch_operands = 0 : i64, tpu.core_type = #tpu.core_type<tc>, window_params = [{transform_indices = @transform_0, window_bounds = array<i64: 64, 32>}, {pipeline_mode = #tpu.pipeline_mode<synchronous>, transform_indices = @transform_1, window_bounds = array<i64: 32, 256>}, {pipeline_mode = #tpu.pipeline_mode<synchronous>, transform_indices = @transform_2, window_bounds = array<i64: 1, 256>}, {pipeline_mode = #tpu.pipeline_mode<synchronous>, transform_indices = @transform_3, window_bounds = array<i64: 256, 256>}, {pipeline_mode = #tpu.pipeline_mode<synchronous>, transform_indices = @transform_4, window_bounds = array<i64: 1, 256>}, {pipeline_mode = #tpu.pipeline_mode<synchronous>, transform_indices = @transform_5, window_bounds = array<i64: 256, 128>}, {pipeline_mode = #tpu.pipeline_mode<synchronous>, transform_indices = @transform_6, window_bounds = array<i64: 1, 128>}, {transform_indices = @transform_7, window_bounds = array<i64: 64, 128>}]} {
    %c0 = arith.constant 0 : index
    %c0_0 = arith.constant 0 : index
    %0 = vector.load %arg1[%c0, %c0_0] : memref<64x32xbf16, #tpu.memory_space<vmem>>, vector<64x32xbf16>
    %c0_1 = arith.constant 0 : index
    %c0_2 = arith.constant 0 : index
    %1 = vector.load %arg2[%c0_1, %c0_2] : memref<32x256xbf16, #tpu.memory_space<vmem>>, vector<32x256xbf16>
    %cst = arith.constant dense<0.000000e+00> : vector<64x256xf32>
    %2 = tpu.matmul %0, %1, %cst {dimension_numbers = #tpu.dot_dimension_numbers<[1], [0], [0], [1], [0, 0, 1, 1], [], []>} : vector<64x32xbf16>, vector<32x256xbf16>, vector<64x256xf32> -> vector<64x256xf32>
    %c0_3 = arith.constant 0 : index
    %c0_4 = arith.constant 0 : index
    %3 = vector.load %arg3[%c0_3, %c0_4] : memref<1x256xf32, #tpu.memory_space<vmem>>, vector<1x256xf32>
    %4 = vector.broadcast %3 : vector<1x256xf32> to vector<64x256xf32>
    %5 = arith.addf %2, %4 : vector<64x256xf32>
    %cst_5 = arith.constant 0.000000e+00 : f32
    %6 = vector.broadcast %cst_5 : f32 to vector<64x256xf32>
    %7 = arith.maximumf %5, %6 : vector<64x256xf32>
    %8 = arith.truncf %7 : vector<64x256xf32> to vector<64x256xbf16>
    %c0_6 = arith.constant 0 : index
    %c0_7 = arith.constant 0 : index
    %9 = vector.load %arg4[%c0_6, %c0_7] : memref<256x256xbf16, #tpu.memory_space<vmem>>, vector<256x256xbf16>
    %cst_8 = arith.constant dense<0.000000e+00> : vector<64x256xf32>
    %10 = tpu.matmul %8, %9, %cst_8 {dimension_numbers = #tpu.dot_dimension_numbers<[1], [0], [0], [1], [0, 0, 1, 1], [], []>} : vector<64x256xbf16>, vector<256x256xbf16>, vector<64x256xf32> -> vector<64x256xf32>
    %c0_9 = arith.constant 0 : index
    %c0_10 = arith.constant 0 : index
    %11 = vector.load %arg5[%c0_9, %c0_10] : memref<1x256xf32, #tpu.memory_space<vmem>>, vector<1x256xf32>
    %12 = vector.broadcast %11 : vector<1x256xf32> to vector<64x256xf32>
    %13 = arith.addf %10, %12 : vector<64x256xf32>
    %cst_11 = arith.constant 0.000000e+00 : f32
    %14 = vector.broadcast %cst_11 : f32 to vector<64x256xf32>
    %15 = arith.maximumf %13, %14 : vector<64x256xf32>
    %16 = arith.truncf %15 : vector<64x256xf32> to vector<64x256xbf16>
    %c0_12 = arith.constant 0 : index
    %c0_13 = arith.constant 0 : index
    %17 = vector.load %arg6[%c0_12, %c0_13] : memref<256x128xbf16, #tpu.memory_space<vmem>>, vector<256x128xbf16>
    %cst_14 = arith.constant dense<0.000000e+00> : vector<64x128xf32>
    %18 = tpu.matmul %16, %17, %cst_14 {dimension_numbers = #tpu.dot_dimension_numbers<[1], [0], [0], [1], [0, 0, 1, 1], [], []>} : vector<64x256xbf16>, vector<256x128xbf16>, vector<64x128xf32> -> vector<64x128xf32>
    %c0_15 = arith.constant 0 : index
    %c0_16 = arith.constant 0 : index
    %19 = vector.load %arg7[%c0_15, %c0_16] : memref<1x128xf32, #tpu.memory_space<vmem>>, vector<1x128xf32>
    %20 = vector.broadcast %19 : vector<1x128xf32> to vector<64x128xf32>
    %21 = arith.addf %18, %20 : vector<64x128xf32>
    %c0_17 = arith.constant 0 : index
    %c0_18 = arith.constant 0 : index
    %22 = vector.load %arg8[%c0_17, %c0_18] : memref<64x128xf32, #tpu.memory_space<vmem>>, vector<64x128xf32>
    tpu.vector_store %arg8[%c0_17, %c0_18], %21 {strides = array<i32>} : memref<64x128xf32, #tpu.memory_space<vmem>>, vector<64x128xf32>,
    return
  }
  func.func @transform_0(%arg0: i32) -> (i32, i32) {
    %c0_i32 = arith.constant 0 : i32
    %c0_i32_0 = arith.constant 0 : i32
    return %arg0, %c0_i32 : i32, i32
  }
  func.func @transform_1(%arg0: i32) -> (i32, i32) {
    %c0_i32 = arith.constant 0 : i32
    %c0_i32_0 = arith.constant 0 : i32
    %c0_i32_1 = arith.constant 0 : i32
    return %c0_i32, %c0_i32_0 : i32, i32
  }
  func.func @transform_2(%arg0: i32) -> (i32, i32) {
    %c0_i32 = arith.constant 0 : i32
    %c0_i32_0 = arith.constant 0 : i32
    %c0_i32_1 = arith.constant 0 : i32
    return %c0_i32, %c0_i32_0 : i32, i32
  }
  func.func @transform_3(%arg0: i32) -> (i32, i32) {
    %c0_i32 = arith.constant 0 : i32
    %c0_i32_0 = arith.constant 0 : i32
    %c0_i32_1 = arith.constant 0 : i32
    return %c0_i32, %c0_i32_0 : i32, i32
  }
  func.func @transform_4(%arg0: i32) -> (i32, i32) {
    %c0_i32 = arith.constant 0 : i32
    %c0_i32_0 = arith.constant 0 : i32
    %c0_i32_1 = arith.constant 0 : i32
    return %c0_i32, %c0_i32_0 : i32, i32
  }
  func.func @transform_5(%arg0: i32) -> (i32, i32) {
    %c0_i32 = arith.constant 0 : i32
    %c0_i32_0 = arith.constant 0 : i32
    %c0_i32_1 = arith.constant 0 : i32
    return %c0_i32, %c0_i32_0 : i32, i32
  }
  func.func @transform_6(%arg0: i32) -> (i32, i32) {
    %c0_i32 = arith.constant 0 : i32
    %c0_i32_0 = arith.constant 0 : i32
    %c0_i32_1 = arith.constant 0 : i32
    return %c0_i32, %c0_i32_0 : i32, i32
  }
  func.func @transform_7(%arg0: i32) -> (i32, i32) {
    %c0_i32 = arith.constant 0 : i32
    %c0_i32_0 = arith.constant 0 : i32
    return %arg0, %c0_i32 : i32, i32
  }
}

</mosaic_0001>

<llo_original>
// kernel: tpu_custom_call.1
$region0: #{tpu_custom_call.1}
  #allocation0 [shape = 'u32[]', space=smem, size = 0x4, offset = 0x4, fixed_abs, tag = 'smem constant byte address 0x4 - core index']
  #allocation1 [shape = 'u32[72,128]{1,0:T(1,128)}', space=vmem, size = 0x9000, scoped, tag = 'internal scratch']
  %s0 = inlined_call_operand.vmem [shape: bf16[256,32], index: 0, kind: input, shape index: {}]
  %s1 = inlined_call_operand.vmem [shape: bf16[32,256], index: 1, kind: input, shape index: {}]
  %s2 = inlined_call_operand.vmem [shape: f32[1,256], index: 2, kind: input, shape index: {}]
  %s3 = inlined_call_operand.hbm [shape: bf16[256,256], index: 3, kind: input, shape index: {}]
  %s4 = inlined_call_operand.vmem [shape: f32[1,256], index: 4, kind: input, shape index: {}]
  %s5 = inlined_call_operand.vmem [shape: bf16[256,128], index: 5, kind: input, shape index: {}]
  %s6 = inlined_call_operand.vmem [shape: f32[1,128], index: 6, kind: input, shape index: {}]
  %s7 = inlined_call_operand.hbm [shape: f32[256,128], index: 7, kind: output, shape index: {}]
  %s8 = sld [smem:[#allocation0]]
  $region65: #{tpu_custom_call.1} parent=0
    _
  %s10 = ssub.s32 1, %s8
  %s11 = scalar_select 0, %s10, %s8
  $region1: #{tpu_custom_call.1} parent=0
    #allocation2 [shape = 'u8[131072]{0}', space=vmem, size = 0x20000, scoped, tag = 'input window, operand 3, single buffered']
    #allocation3 [shape = 's32[2]{0}', space=sflag, size = 0x8, scoped, tag = 'scoped memory for tpu_custom_call.1']
    #allocation4 [shape = 's32[2]{0}', space=sflag, size = 0x8, scoped, tag = 'scoped memory for tpu_custom_call.1']
    #allocation5 [shape = 'u8[65536]{0}', space=vmem, size = 0x10000, scoped, tag = 'output window, operand 0']
    %12 = vsyncpa [#allocation3], 0
    %13 = vsyncpa [#allocation4], 0
    %s14 = scalar_lea.sflag [#allocation4], 1
    %15 = vsyncpa %s14, 0
    loop: start=0, step=1, limit=6
    $region2: #{tpu_custom_call.1} parent=1 // loop_pre_header
      _
    $region3: #{tpu_custom_call.1} parent=1 // loop_header
      %s17 = sphi 0, %s21
      %p18 = scmp.ge.s32.totalorder %s17, 6
      %s27 = sphi 0, %s29
      %s30 = sphi 0, %s27
      %s31 = sphi 0, %s30
      %s47 = sphi 0, %s31
      %s51 = sphi 0, %s51
      %s53 = sphi 0, %s51
      %s54 = sphi 0, %s53
      %s68 = sphi 0, %s54
      %s72 = sphi 0, %s72
      %s74 = sphi 0, %s72
      %s75 = sphi 0, %s74
      %s89 = sphi 0, %s75
      %s93 = sphi 0, %s93
      %s95 = sphi 0, %s93
      %s96 = sphi 0, %s95
      %s110 = sphi 0, %s96
      %s114 = sphi 0, %s114
      %s116 = sphi 0, %s114
      %s117 = sphi 0, %s116
      %s131 = sphi 0, %s117
      %s135 = sphi 0, %s135
      %s137 = sphi 0, %s135
      %s138 = sphi 0, %s137
      %s152 = sphi 0, %s138
      %s156 = sphi 0, %s156
      %s158 = sphi 0, %s156
      %s159 = sphi 0, %s158
      %s173 = sphi 0, %s159
      %s179 = sphi 0, %s181
      %s182 = sphi 0, %s179
      %s183 = sphi 0, %s182
      %s199 = sphi 0, %s183
    $region4: #{tpu_custom_call.1} parent=1 // loop_header_branch
      %20 = sbr.rel (%p18) target = $region8
    $region5: #{tpu_custom_call.1} parent=1 // loop_body
      %s22 = ssub.s32 %s17, 1
      %s23 = ssub.s32 %s17, 2
      %s24 = sadd.s32 %s17, 1
      %s25 = ssub.s32 %s17, %s24
      %p26 = scmp.eq.s32.totalorder %s25, 0
      %s28 = sadd.s32 %s27, 1
      %s29 = scalar_select %p26, %s27, %s28
      %p32 = pneg %p26
      %p33 = scmp.eq.s32.totalorder %s17, 3
      %p34 = por %p32, %p33
      %p35 = scmp.ne.s32.totalorder %s27, %s30
      %p36 = scmp.eq.s32.totalorder %s17, 0
      %p37 = por %p35, %p36
      %p38 = scmp.ne.s32.totalorder %s27, %s30
      %p39 = scmp.eq.s32.totalorder %s22, 3
      %p40 = por %p38, %p39
      %p41 = scmp.ne.s32.totalorder %s30, %s31
      %p42 = scmp.eq.s32.totalorder %s22, 0
      %p43 = por %p41, %p42
      %p44 = scmp.ne.s32.totalorder %s30, %s31
      %p45 = scmp.eq.s32.totalorder %s23, 3
      %p46 = por %p44, %p45
      %p48 = scmp.ne.s32.totalorder %s31, %s47
      %p49 = scmp.eq.s32.totalorder %s23, 0
      %p50 = por %p48, %p49
      %s52 = sadd.s32 %s51, 1
      %p55 = scmp.eq.s32.totalorder %s17, 3
      %p56 = scmp.ne.s32.totalorder %s51, %s53
      %p57 = scmp.eq.s32.totalorder %s17, 0
      %p58 = por %p56, %p57
      %p59 = scmp.ne.s32.totalorder %s51, %s53
      %p60 = scmp.eq.s32.totalorder %s22, 3
      %p61 = por %p59, %p60
      %p62 = scmp.ne.s32.totalorder %s53, %s54
      %p63 = scmp.eq.s32.totalorder %s22, 0
      %p64 = por %p62, %p63
      %p65 = scmp.ne.s32.totalorder %s53, %s54
      %p66 = scmp.eq.s32.totalorder %s23, 3
      %p67 = por %p65, %p66
      %p69 = scmp.ne.s32.totalorder %s54, %s68
      %p70 = scmp.eq.s32.totalorder %s23, 0
      %p71 = por %p69, %p70
      %s73 = sadd.s32 %s72, 1
      %p76 = scmp.eq.s32.totalorder %s17, 3
      %p77 = scmp.ne.s32.totalorder %s72, %s74
      %p78 = scmp.eq.s32.totalorder %s17, 0
      %p79 = por %p77, %p78
      %p80 = scmp.ne.s32.totalorder %s72, %s74
      %p81 = scmp.eq.s32.totalorder %s22, 3
      %p82 = por %p80, %p81
      %p83 = scmp.ne.s32.totalorder %s74, %s75
      %p84 = scmp.eq.s32.totalorder %s22, 0
      %p85 = por %p83, %p84
      %p86 = scmp.ne.s32.totalorder %s74, %s75
      %p87 = scmp.eq.s32.totalorder %s23, 3
      %p88 = por %p86, %p87
      %p90 = scmp.ne.s32.totalorder %s75, %s89
      %p91 = scmp.eq.s32.totalorder %s23, 0
      %p92 = por %p90, %p91
      %s94 = sadd.s32 %s93, 1
      %p97 = scmp.eq.s32.totalorder %s17, 3
      %p98 = scmp.ne.s32.totalorder %s93, %s95
      %p99 = scmp.eq.s32.totalorder %s17, 0
      %p100 = por %p98, %p99
      %p101 = scmp.ne.s32.totalorder %s93, %s95
      %p102 = scmp.eq.s32.totalorder %s22, 3
      %p103 = por %p101, %p102
      %p104 = scmp.ne.s32.totalorder %s95, %s96
      %p105 = scmp.eq.s32.totalorder %s22, 0
      %p106 = por %p104, %p105
      %p107 = scmp.ne.s32.totalorder %s95, %s96
      %p108 = scmp.eq.s32.totalorder %s23, 3
      %p109 = por %p107, %p108
      %p111 = scmp.ne.s32.totalorder %s96, %s110
      %p112 = scmp.eq.s32.totalorder %s23, 0
      %p113 = por %p111, %p112
      %s115 = sadd.s32 %s114, 1
      %p118 = scmp.eq.s32.totalorder %s17, 3
      %p119 = scmp.ne.s32.totalorder %s114, %s116
      %p120 = scmp.eq.s32.totalorder %s17, 0
      %p121 = por %p119, %p120
      %p122 = scmp.ne.s32.totalorder %s114, %s116
      %p123 = scmp.eq.s32.totalorder %s22, 3
      %p124 = por %p122, %p123
      %p125 = scmp.ne.s32.totalorder %s116, %s117
      %p126 = scmp.eq.s32.totalorder %s22, 0
      %p127 = por %p125, %p126
      %p128 = scmp.ne.s32.totalorder %s116, %s117
      %p129 = scmp.eq.s32.totalorder %s23, 3
      %p130 = por %p128, %p129
      %p132 = scmp.ne.s32.totalorder %s117, %s131
      %p133 = scmp.eq.s32.totalorder %s23, 0
      %p134 = por %p132, %p133
      %s136 = sadd.s32 %s135, 1
      %p139 = scmp.eq.s32.totalorder %s17, 3
      %p140 = scmp.ne.s32.totalorder %s135, %s137
      %p141 = scmp.eq.s32.totalorder %s17, 0
      %p142 = por %p140, %p141
      %p143 = scmp.ne.s32.totalorder %s135, %s137
      %p144 = scmp.eq.s32.totalorder %s22, 3
      %p145 = por %p143, %p144
      %p146 = scmp.ne.s32.totalorder %s137, %s138
      %p147 = scmp.eq.s32.totalorder %s22, 0
      %p148 = por %p146, %p147
      %p149 = scmp.ne.s32.totalorder %s137, %s138
      %p150 = scmp.eq.s32.totalorder %s23, 3
      %p151 = por %p149, %p150
      %p153 = scmp.ne.s32.totalorder %s138, %s152
      %p154 = scmp.eq.s32.totalorder %s23, 0
      %p155 = por %p153, %p154
      %s157 = sadd.s32 %s156, 1
      %p160 = scmp.eq.s32.totalorder %s17, 3
      %p161 = scmp.ne.s32.totalorder %s156, %s158
      %p162 = scmp.eq.s32.totalorder %s17, 0
      %p163 = por %p161, %p162
      %p164 = scmp.ne.s32.totalorder %s156, %s158
      %p165 = scmp.eq.s32.totalorder %s22, 3
      %p166 = por %p164, %p165
      %p167 = scmp.ne.s32.totalorder %s158, %s159
      %p168 = scmp.eq.s32.totalorder %s22, 0
      %p169 = por %p167, %p168
      %p170 = scmp.ne.s32.totalorder %s158, %s159
      %p171 = scmp.eq.s32.totalorder %s23, 3
      %p172 = por %p170, %p171
      %p174 = scmp.ne.s32.totalorder %s159, %s173
      %p175 = scmp.eq.s32.totalorder %s23, 0
      %p176 = por %p174, %p175
      %s177 = ssub.s32 %s17, %s24
      %p178 = scmp.eq.s32.totalorder %s177, 0
      %s180 = sadd.s32 %s179, 1
      %s181 = scalar_select %p178, %s179, %s180
      %p184 = pneg %p178
      %p185 = scmp.eq.s32.totalorder %s17, 3
      %p186 = por %p184, %p185
      %p187 = scmp.ne.s32.totalorder %s179, %s182
      %p188 = scmp.eq.s32.totalorder %s17, 0
      %p189 = por %p187, %p188
      %p190 = scmp.ne.s32.totalorder %s179, %s182
      %p191 = scmp.eq.s32.totalorder %s22, 3
      %p192 = por %p190, %p191
      %p193 = scmp.ne.s32.totalorder %s182, %s183
      %p194 = scmp.eq.s32.totalorder %s22, 0
      %p195 = por %p193, %p194
      %p196 = scmp.ne.s32.totalorder %s182, %s183
      %p197 = scmp.eq.s32.totalorder %s23, 3
      %p198 = por %p196, %p197
      %p200 = scmp.ne.s32.totalorder %s183, %s199
      %p201 = scmp.eq.s32.totalorder %s23, 0
      %p202 = por %p200, %p201
      %p203 = scmp.le.s32.totalorder 1, %s17
      %p204 = scmp.lt.s32.totalorder %s17, 5
      %p205 = pnand %p203, %p204
      %p206 = pneg %p205
      // Predicated region
      $region9: #{tpu_custom_call.1} parent=5 // pred_check
        _
      $region10: #{tpu_custom_call.1} parent=5 // pred_check_branch
        %208 = sbr.rel (%p205) target = $region12
      $region11: #{tpu_custom_call.1} parent=5 // pred_region
        %s209 = ssub.s32 %s17, 1
        // Predicated region
        $region13: #{tpu_custom_call.1} parent=11 // pred_check
          %p210 = pneg %p64
        $region14: #{tpu_custom_call.1} parent=11 // pred_check_branch
          %212 = sbr.rel (%p210) target = $region16
        $region15: #{tpu_custom_call.1} parent=11 // pred_region
          _
        $region16: #{tpu_custom_call.1} parent=11 // pred_fallthru
          _
        // Predicated region
        $region17: #{tpu_custom_call.1} parent=11 // pred_check
          %p213 = pneg %p85
        $region18: #{tpu_custom_call.1} parent=11 // pred_check_branch
          %215 = sbr.rel (%p213) target = $region20
        $region19: #{tpu_custom_call.1} parent=11 // pred_region
          _
        $region20: #{tpu_custom_call.1} parent=11 // pred_fallthru
          _
        // Predicated region
        $region21: #{tpu_custom_call.1} parent=11 // pred_check
          %p216 = pneg %p106
        $region22: #{tpu_custom_call.1} parent=11 // pred_check_branch
          %218 = sbr.rel (%p216) target = $region24
        $region23: #{tpu_custom_call.1} parent=11 // pred_region
          %220 = vsyncadd [#allocation3], 0
          %s221 = sshll.u32 %s3, 4
          %s222 = int_to_ptr.hbm [resolvable:$true] %s221
          %s223 = sshll.u32 [#allocation2], 4
          %s224 = int_to_ptr.vmem [resolvable:$true] %s223
          %229 = dma.hbm_to_vmem [thread:$0]  %s222, 4096, %s224, [#allocation3], 128, 128, 8
        $region24: #{tpu_custom_call.1} parent=11 // pred_fallthru
          _
        // Predicated region
        $region25: #{tpu_custom_call.1} parent=11 // pred_check
          %p230 = pneg %p127
        $region26: #{tpu_custom_call.1} parent=11 // pred_check_branch
          %232 = sbr.rel (%p230) target = $region28
        $region27: #{tpu_custom_call.1} parent=11 // pred_region
          _
        $region28: #{tpu_custom_call.1} parent=11 // pred_fallthru
          _
        // Predicated region
        $region29: #{tpu_custom_call.1} parent=11 // pred_check
          %p233 = pneg %p148
        $region30: #{tpu_custom_call.1} parent=11 // pred_check_branch
          %235 = sbr.rel (%p233) target = $region32
        $region31: #{tpu_custom_call.1} parent=11 // pred_region
          _
        $region32: #{tpu_custom_call.1} parent=11 // pred_fallthru
          _
        // Predicated region
        $region33: #{tpu_custom_call.1} parent=11 // pred_check
          %p236 = pneg %p169
        $region34: #{tpu_custom_call.1} parent=11 // pred_check_branch
          %238 = sbr.rel (%p236) target = $region36
        $region35: #{tpu_custom_call.1} parent=11 // pred_region
          _
        $region36: #{tpu_custom_call.1} parent=11 // pred_fallthru
          _
      $region12: #{tpu_custom_call.1} parent=5 // pred_fallthru
        _
      %p239 = scmp.lt.s32.totalorder %s17, 4
      // Predicated region
      $region37: #{tpu_custom_call.1} parent=5 // pred_check
        %p240 = pneg %p239
      $region38: #{tpu_custom_call.1} parent=5 // pred_check_branch
        %242 = sbr.rel (%p240) target = $region40
      $region39: #{tpu_custom_call.1} parent=5 // pred_region
        // Predicated region
        $region41: #{tpu_custom_call.1} parent=39 // pred_check
          %p243 = pneg %p37
        $region42: #{tpu_custom_call.1} parent=39 // pred_check_branch
          %245 = sbr.rel (%p243) target = $region44
        $region43: #{tpu_custom_call.1} parent=39 // pred_region
          %s246 = smul.u32 8, %s17
          %p247 = scmp.lt.s32.totalorder %s246, 31
          %s248 = scalar_select %p247, %s246, 31
          %s249 = smul.addr %s248, 4
          %s250 = scalar_lea.vmem %s0, %s249
          %s251 = smul.u32 8, %s17
        $region44: #{tpu_custom_call.1} parent=39 // pred_fallthru
          _
      $region40: #{tpu_custom_call.1} parent=5 // pred_fallthru
        _
      %p252 = scmp.le.s32.totalorder 1, %s17
      %p253 = scmp.lt.s32.totalorder %s17, 5
      %p254 = pnand %p252, %p253
      %p255 = pneg %p254
      // Predicated region
      $region45: #{tpu_custom_call.1} parent=5 // pred_check
        _
      $region46: #{tpu_custom_call.1} parent=5 // pred_check_branch
        %257 = sbr.rel (%p254) target = $region48
      $region47: #{tpu_custom_call.1} parent=5 // pred_region
        %s258 = ssub.s32 %s17, 1
        // Predicated region
        $region49: #{tpu_custom_call.1} parent=47 // pred_check
          %p259 = pneg %p106
        $region50: #{tpu_custom_call.1} parent=47 // pred_check_branch
          %261 = sbr.rel (%p259) target = $region52
        $region51: #{tpu_custom_call.1} parent=47 // pred_region
          %263 = dma.done [#allocation3], 4096
        $region52: #{tpu_custom_call.1} parent=47 // pred_fallthru
          _
        %s264 = smul.u32 8, %s22
        %p265 = scmp.lt.s32.totalorder %s264, 31
        %s266 = scalar_select %p265, %s264, 31
        %s267 = smul.addr %s266, 4
        %s268 = scalar_lea.vmem %s0, %s267
        %p269 = pneg %p43
        %p270 = pneg %p40
        %p271 = pneg %p64
        %p272 = pneg %p61
        %p273 = pneg %p85
        %p274 = pneg %p82
        %p275 = pneg %p106
        %p276 = pneg %p103
        %p277 = pneg %p127
        %p278 = pneg %p124
        %p279 = pneg %p148
        %p280 = pneg %p145
        %p281 = pneg %p169
        %p282 = pneg %p166
        %p283 = pneg %p195
        %p284 = pneg %p192
        %s285 = sand.u32 %s182, 1
        %s286 = scalar_lea.sflag [#allocation4], %s285
        %s287 = sand.u32 %s182, 1
        %s288 = smul.addr %s287, 64
        %s289 = scalar_lea.vmem [#allocation5], %s288
        %s290 = smul.u32 8, %s22
        %p291 = scmp.lt.s32.totalorder %s290, 31
        %s292 = scalar_select %p291, %s290, 31
        %s293 = smul.addr %s292, 4
        %s294 = scalar_lea.vmem %s0, %s293
        %s295 = smul.u32 8, %s22
        %s296 = smul.u32 8, %s22
        %v298 = vld [vmem:[%s294] sm:$0xf]
        %v299 = vld [vmem:[%s294 + $0x4] sm:$0xf]
        %v300 = vld [vmem:[%s294 + $0x8] sm:$0xf]
        %v301 = vld [vmem:[%s294 + $0xc] sm:$0xf]
        %v302 = vld [vmem:[%s294 + $0x10] sm:$0xf]
        %v303 = vld [vmem:[%s294 + $0x14] sm:$0xf]
        %v304 = vld [vmem:[%s294 + $0x18] sm:$0xf]
        %v305 = vld [vmem:[%s294 + $0x1c] sm:$0xf]
        %v306 = vld [vmem:[%s1] sm:$0xff]
        %v307 = vld [vmem:[%s1 + $0x8] sm:$0xff]
        %v308 = vld [vmem:[%s1 + $0x10] sm:$0xff]
        %v309 = vld [vmem:[%s1 + $0x18] sm:$0xff]
        %v310 = vld [vmem:[%s2] sm:$0x3]
        %v312 = vperm.slane %v310, 0
        %v313 = vperm.slane %v310, 1
        %v324 = vunpack.c.l.b16 %v298
        %v325 = vunpack.c.l.b16 %v299
        %v326 = vunpack.c.l.b16 %v300
        %v327 = vunpack.c.l.b16 %v301
        %v328 = vunpack.c.l.b16 %v302
        %v329 = vunpack.c.l.b16 %v303
        %v330 = vunpack.c.l.b16 %v304
        %v331 = vunpack.c.l.b16 %v305
        %v332 = vpack.c.b16 %v325, %v324
        %v333 = vpack.c.b16 %v327, %v326
        %v334 = vpack.c.b16 %v329, %v328
        %v335 = vpack.c.b16 %v331, %v330
        %v340 = vunpack.c.l.b16 %v306
        %v341 = vunpack.c.h.b16 %v306
        %v342 = vunpack.c.l.b16 %v307
        %v343 = vunpack.c.h.b16 %v307
        %v344 = vunpack.c.l.b16 %v308
        %v345 = vunpack.c.h.b16 %v308
        %v346 = vunpack.c.l.b16 %v309
        %v347 = vunpack.c.h.b16 %v309
        %v348 = vpack.c.b16 %v342, %v340
        %v349 = vpack.c.b16 %v343, %v341
        %v350 = vpack.c.b16 %v346, %v344
        %v351 = vpack.c.b16 %v347, %v345
        %vm356 = vcmask 261120
        %v358 = vsel %vm356, %v332, 0
        %v361 = vsel %vm356, %v333, 0
        %v364 = vsel %vm356, %v334, 0
        %v367 = vsel %vm356, %v335, 0
        %369 = vmatpush.bf16.msra.mxu0 0
        %370 = vmatpush.bf16.msra.mxu0 0
        %371 = vmatpush.bf16.msra.mxu0 0
        %372 = vmatpush.bf16.msra.mxu0 0
        %373 = vmatpush.bf16.msra.mxu0 0
        %374 = vmatpush.bf16.msra.mxu0 0
        %375 = vmatpush.bf16.msra.mxu0 %v350
        %376 = vmatpush.bf16.msra.mxu0 %v348
        %377 = vmatmul.bf16.gmra.mxu0 %v358
        %v378 = vpop.f32.mrf.mxu0
        %v379 = vadd.f32 %v312, %v378
        %v380 = vpop.f32.mrf.mxu0
        %v381 = vadd.f32 %v312, %v380
        %382 = vmatmul.bf16.gmra.mxu0 %v361
        %v383 = vpop.f32.mrf.mxu0
        %v384 = vadd.f32 %v312, %v383
        %v385 = vpop.f32.mrf.mxu0
        %v386 = vadd.f32 %v312, %v385
        %387 = vmatmul.bf16.gmra.mxu0 %v364
        %v388 = vpop.f32.mrf.mxu0
        %v389 = vadd.f32 %v312, %v388
        %v390 = vpop.f32.mrf.mxu0
        %v391 = vadd.f32 %v312, %v390
        %392 = vmatmul.bf16.gmra.mxu0 %v367
        %v393 = vpop.f32.mrf.mxu0
        %v394 = vadd.f32 %v312, %v393
        %v395 = vpop.f32.mrf.mxu0
        %v396 = vadd.f32 %v312, %v395
        %397 = vdwg.mxu0
        %398 = vmatpush.bf16.msra.mxu0 0
        %399 = vmatpush.bf16.msra.mxu0 0
        %400 = vmatpush.bf16.msra.mxu0 0
        %401 = vmatpush.bf16.msra.mxu0 0
        %402 = vmatpush.bf16.msra.mxu0 0
        %403 = vmatpush.bf16.msra.mxu0 0
        %404 = vmatpush.bf16.msra.mxu0 %v351
        %405 = vmatpush.bf16.msra.mxu0 %v349
        %406 = vmatmul.bf16.gmra.mxu0 %v358
        %v407 = vpop.f32.mrf.mxu0
        %v408 = vadd.f32 %v313, %v407
        %v409 = vpop.f32.mrf.mxu0
        %v410 = vadd.f32 %v313, %v409
        %411 = vmatmul.bf16.gmra.mxu0 %v361
        %v412 = vpop.f32.mrf.mxu0
        %v413 = vadd.f32 %v313, %v412
        %v414 = vpop.f32.mrf.mxu0
        %v415 = vadd.f32 %v313, %v414
        %416 = vmatmul.bf16.gmra.mxu0 %v364
        %v417 = vpop.f32.mrf.mxu0
        %v418 = vadd.f32 %v313, %v417
        %v419 = vpop.f32.mrf.mxu0
        %v420 = vadd.f32 %v313, %v419
        %421 = vmatmul.bf16.gmra.mxu0 %v367
        %v422 = vpop.f32.mrf.mxu0
        %v423 = vadd.f32 %v313, %v422
        %v424 = vpop.f32.mrf.mxu0
        %v425 = vadd.f32 %v313, %v424
        %426 = vdwg.mxu0
        %v427 = vmax.f32 %v379, 0.0
        %v428 = vmax.f32 %v408, 0.0
        %v429 = vmax.f32 %v381, 0.0
        %v430 = vmax.f32 %v410, 0.0
        %v431 = vmax.f32 %v384, 0.0
        %v432 = vmax.f32 %v413, 0.0
        %v433 = vmax.f32 %v386, 0.0
        %v434 = vmax.f32 %v415, 0.0
        %v435 = vmax.f32 %v389, 0.0
        %v436 = vmax.f32 %v418, 0.0
        %v437 = vmax.f32 %v391, 0.0
        %v438 = vmax.f32 %v420, 0.0
        %v439 = vmax.f32 %v394, 0.0
        %v440 = vmax.f32 %v423, 0.0
        %v441 = vmax.f32 %v396, 0.0
        %v442 = vmax.f32 %v425, 0.0
        %v443 = vpack.c.bf16 %v429, %v427
        %v444 = vpack.c.bf16 %v430, %v428
        %v445 = vpack.c.bf16 %v433, %v431
        %v446 = vpack.c.bf16 %v434, %v432
        %v447 = vpack.c.bf16 %v437, %v435
        %v448 = vpack.c.bf16 %v438, %v436
        %v449 = vpack.c.bf16 %v441, %v439
        %v450 = vpack.c.bf16 %v442, %v440
        %v451 = vld [vmem:[#allocation2] sm:$0xff]
        %v452 = vld [vmem:[#allocation2 + $0x8] sm:$0xff]
        %v453 = vld [vmem:[#allocation2 + $0x10] sm:$0xff]
        %v454 = vld [vmem:[#allocation2 + $0x18] sm:$0xff]
        %v455 = vld [vmem:[#allocation2 + $0x20] sm:$0xff]
        %v456 = vld [vmem:[#allocation2 + $0x28] sm:$0xff]
        %v457 = vld [vmem:[#allocation2 + $0x30] sm:$0xff]
        %v458 = vld [vmem:[#allocation2 + $0x38] sm:$0xff]
        %v459 = vld [vmem:[#allocation2 + $0x40] sm:$0xff]
        %v460 = vld [vmem:[#allocation2 + $0x48] sm:$0xff]
        %v461 = vld [vmem:[#allocation2 + $0x50] sm:$0xff]
        %v462 = vld [vmem:[#allocation2 + $0x58] sm:$0xff]
        %v463 = vld [vmem:[#allocation2 + $0x60] sm:$0xff]
        %v464 = vld [vmem:[#allocation2 + $0x68] sm:$0xff]
        %v465 = vld [vmem:[#allocation2 + $0x70] sm:$0xff]
        %v466 = vld [vmem:[#allocation2 + $0x78] sm:$0xff]
        %v467 = vld [vmem:[#allocation2 + $0x80] sm:$0xff]
        %v468 = vld [vmem:[#allocation2 + $0x88] sm:$0xff]
        %v469 = vld [vmem:[#allocation2 + $0x90] sm:$0xff]
        %v470 = vld [vmem:[#allocation2 + $0x98] sm:$0xff]
        %v471 = vld [vmem:[#allocation2 + $0xa0] sm:$0xff]
        %v472 = vld [vmem:[#allocation2 + $0xa8] sm:$0xff]
        %v473 = vld [vmem:[#allocation2 + $0xb0] sm:$0xff]
        %v474 = vld [vmem:[#allocation2 + $0xb8] sm:$0xff]
        %v475 = vld [vmem:[#allocation2 + $0xc0] sm:$0xff]
        %v476 = vld [vmem:[#allocation2 + $0xc8] sm:$0xff]
        %v477 = vld [vmem:[#allocation2 + $0xd0] sm:$0xff]
        %v478 = vld [vmem:[#allocation2 + $0xd8] sm:$0xff]
        %v479 = vld [vmem:[#allocation2 + $0xe0] sm:$0xff]
        %v480 = vld [vmem:[#allocation2 + $0xe8] sm:$0xff]
        %v481 = vld [vmem:[#allocation2 + $0xf0] sm:$0xff]
        %v482 = vld [vmem:[#allocation2 + $0xf8] sm:$0xff]
        %v483 = vld [vmem:[%s4] sm:$0x3]
        %v485 = vperm.slane %v483, 0
        %v486 = vperm.slane %v483, 1
        %v521 = vunpack.c.l.b16 %v451
        %v522 = vunpack.c.h.b16 %v451
        %v523 = vunpack.c.l.b16 %v452
        %v524 = vunpack.c.h.b16 %v452
        %v525 = vunpack.c.l.b16 %v453
        %v526 = vunpack.c.h.b16 %v453
        %v527 = vunpack.c.l.b16 %v454
        %v528 = vunpack.c.h.b16 %v454
        %v529 = vunpack.c.l.b16 %v455
        %v530 = vunpack.c.h.b16 %v455
        %v531 = vunpack.c.l.b16 %v456
        %v532 = vunpack.c.h.b16 %v456
        %v533 = vunpack.c.l.b16 %v457
        %v534 = vunpack.c.h.b16 %v457
        %v535 = vunpack.c.l.b16 %v458
        %v536 = vunpack.c.h.b16 %v458
        %v537 = vunpack.c.l.b16 %v459
        %v538 = vunpack.c.h.b16 %v459
        %v539 = vunpack.c.l.b16 %v460
        %v540 = vunpack.c.h.b16 %v460
        %v541 = vunpack.c.l.b16 %v461
        %v542 = vunpack.c.h.b16 %v461
        %v543 = vunpack.c.l.b16 %v462
        %v544 = vunpack.c.h.b16 %v462
        %v545 = vunpack.c.l.b16 %v463
        %v546 = vunpack.c.h.b16 %v463
        %v547 = vunpack.c.l.b16 %v464
        %v548 = vunpack.c.h.b16 %v464
        %v549 = vunpack.c.l.b16 %v465
        %v550 = vunpack.c.h.b16 %v465
        %v551 = vunpack.c.l.b16 %v466
        %v552 = vunpack.c.h.b16 %v466
        %v553 = vunpack.c.l.b16 %v467
        %v554 = vunpack.c.h.b16 %v467
        %v555 = vunpack.c.l.b16 %v468
        %v556 = vunpack.c.h.b16 %v468
        %v557 = vunpack.c.l.b16 %v469
        %v558 = vunpack.c.h.b16 %v469
        %v559 = vunpack.c.l.b16 %v470
        %v560 = vunpack.c.h.b16 %v470
        %v561 = vunpack.c.l.b16 %v471
        %v562 = vunpack.c.h.b16 %v471
        %v563 = vunpack.c.l.b16 %v472
        %v564 = vunpack.c.h.b16 %v472
        %v565 = vunpack.c.l.b16 %v473
        %v566 = vunpack.c.h.b16 %v473
        %v567 = vunpack.c.l.b16 %v474
        %v568 = vunpack.c.h.b16 %v474
        %v569 = vunpack.c.l.b16 %v475
        %v570 = vunpack.c.h.b16 %v475
        %v571 = vunpack.c.l.b16 %v476
        %v572 = vunpack.c.h.b16 %v476
        %v573 = vunpack.c.l.b16 %v477
        %v574 = vunpack.c.h.b16 %v477
        %v575 = vunpack.c.l.b16 %v478
        %v576 = vunpack.c.h.b16 %v478
        %v577 = vunpack.c.l.b16 %v479
        %v578 = vunpack.c.h.b16 %v479
        %v579 = vunpack.c.l.b16 %v480
        %v580 = vunpack.c.h.b16 %v480
        %v581 = vunpack.c.l.b16 %v481
        %v582 = vunpack.c.h.b16 %v481
        %v583 = vunpack.c.l.b16 %v482
        %v584 = vunpack.c.h.b16 %v482
        %v585 = vpack.c.b16 %v523, %v521
        %v586 = vpack.c.b16 %v524, %v522
        %v587 = vpack.c.b16 %v527, %v525
        %v588 = vpack.c.b16 %v528, %v526
        %v589 = vpack.c.b16 %v531, %v529
        %v590 = vpack.c.b16 %v532, %v530
        %v591 = vpack.c.b16 %v535, %v533
        %v592 = vpack.c.b16 %v536, %v534
        %v593 = vpack.c.b16 %v539, %v537
        %v594 = vpack.c.b16 %v540, %v538
        %v595 = vpack.c.b16 %v543, %v541
        %v596 = vpack.c.b16 %v544, %v542
        %v597 = vpack.c.b16 %v547, %v545
        %v598 = vpack.c.b16 %v548, %v546
        %v599 = vpack.c.b16 %v551, %v549
        %v600 = vpack.c.b16 %v552, %v550
        %v601 = vpack.c.b16 %v555, %v553
        %v602 = vpack.c.b16 %v556, %v554
        %v603 = vpack.c.b16 %v559, %v557
        %v604 = vpack.c.b16 %v560, %v558
        %v605 = vpack.c.b16 %v563, %v561
        %v606 = vpack.c.b16 %v564, %v562
        %v607 = vpack.c.b16 %v567, %v565
        %v608 = vpack.c.b16 %v568, %v566
        %v609 = vpack.c.b16 %v571, %v569
        %v610 = vpack.c.b16 %v572, %v570
        %v611 = vpack.c.b16 %v575, %v573
        %v612 = vpack.c.b16 %v576, %v574
        %v613 = vpack.c.b16 %v579, %v577
        %v614 = vpack.c.b16 %v580, %v578
        %v615 = vpack.c.b16 %v583, %v581
        %v616 = vpack.c.b16 %v584, %v582
        %649 = vmatpush.bf16.msra.mxu0 %v599
        %650 = vmatpush.bf16.msra.mxu0 %v597
        %651 = vmatpush.bf16.msra.mxu0 %v595
        %652 = vmatpush.bf16.msra.mxu0 %v593
        %653 = vmatpush.bf16.msra.mxu0 %v591
        %654 = vmatpush.bf16.msra.mxu0 %v589
        %655 = vmatpush.bf16.msra.mxu0 %v587
        %656 = vmatpush.bf16.msra.mxu0 %v585
        %657 = vmatmul.bf16.gmra.mxu0 %v443
        %v658 = vpop.f32.mrf.mxu0
        %v659 = vadd.f32 %v485, %v658
        %v660 = vpop.f32.mrf.mxu0
        %v661 = vadd.f32 %v485, %v660
        %662 = vmatmul.bf16.gmra.mxu0 %v445
        %v663 = vpop.f32.mrf.mxu0
        %v664 = vadd.f32 %v485, %v663
        %v665 = vpop.f32.mrf.mxu0
        %v666 = vadd.f32 %v485, %v665
        %667 = vmatmul.bf16.gmra.mxu0 %v447
        %v668 = vpop.f32.mrf.mxu0
        %v669 = vadd.f32 %v485, %v668
        %v670 = vpop.f32.mrf.mxu0
        %v671 = vadd.f32 %v485, %v670
        %672 = vmatmul.bf16.gmra.mxu0 %v449
        %v673 = vpop.f32.mrf.mxu0
        %v674 = vadd.f32 %v485, %v673
        %v675 = vpop.f32.mrf.mxu0
        %v676 = vadd.f32 %v485, %v675
        %677 = vdwg.mxu0
        %678 = vmatpush.bf16.msra.mxu0 %v615
        %679 = vmatpush.bf16.msra.mxu0 %v613
        %680 = vmatpush.bf16.msra.mxu0 %v611
        %681 = vmatpush.bf16.msra.mxu0 %v609
        %682 = vmatpush.bf16.msra.mxu0 %v607
        %683 = vmatpush.bf16.msra.mxu0 %v605
        %684 = vmatpush.bf16.msra.mxu0 %v603
        %685 = vmatpush.bf16.msra.mxu0 %v601
        %686 = vmatmul.bf16.gmra.mxu0 %v444
        %v687 = vpop.f32.mrf.mxu0
        %v688 = vadd.f32 %v659, %v687
        %v689 = vpop.f32.mrf.mxu0
        %v690 = vadd.f32 %v661, %v689
        %691 = vmatmul.bf16.gmra.mxu0 %v446
        %v692 = vpop.f32.mrf.mxu0
        %v693 = vadd.f32 %v664, %v692
        %v694 = vpop.f32.mrf.mxu0
        %v695 = vadd.f32 %v666, %v694
        %696 = vmatmul.bf16.gmra.mxu0 %v448
        %v697 = vpop.f32.mrf.mxu0
        %v698 = vadd.f32 %v669, %v697
        %v699 = vpop.f32.mrf.mxu0
        %v700 = vadd.f32 %v671, %v699
        %701 = vmatmul.bf16.gmra.mxu0 %v450
        %v702 = vpop.f32.mrf.mxu0
        %v703 = vadd.f32 %v674, %v702
        %v704 = vpop.f32.mrf.mxu0
        %v705 = vadd.f32 %v676, %v704
        %706 = vdwg.mxu0
        %707 = vmatpush.bf16.msra.mxu0 %v600
        %708 = vmatpush.bf16.msra.mxu0 %v598
        %709 = vmatpush.bf16.msra.mxu0 %v596
        %710 = vmatpush.bf16.msra.mxu0 %v594
        %711 = vmatpush.bf16.msra.mxu0 %v592
        %712 = vmatpush.bf16.msra.mxu0 %v590
        %713 = vmatpush.bf16.msra.mxu0 %v588
        %714 = vmatpush.bf16.msra.mxu0 %v586
        %715 = vmatmul.bf16.gmra.mxu0 %v443
        %v716 = vpop.f32.mrf.mxu0
        %v717 = vadd.f32 %v486, %v716
        %v718 = vpop.f32.mrf.mxu0
        %v719 = vadd.f32 %v486, %v718
        %720 = vmatmul.bf16.gmra.mxu0 %v445
        %v721 = vpop.f32.mrf.mxu0
        %v722 = vadd.f32 %v486, %v721
        %v723 = vpop.f32.mrf.mxu0
        %v724 = vadd.f32 %v486, %v723
        %725 = vmatmul.bf16.gmra.mxu0 %v447
        %v726 = vpop.f32.mrf.mxu0
        %v727 = vadd.f32 %v486, %v726
        %v728 = vpop.f32.mrf.mxu0
        %v729 = vadd.f32 %v486, %v728
        %730 = vmatmul.bf16.gmra.mxu0 %v449
        %v731 = vpop.f32.mrf.mxu0
        %v732 = vadd.f32 %v486, %v731
        %v733 = vpop.f32.mrf.mxu0
        %v734 = vadd.f32 %v486, %v733
        %735 = vdwg.mxu0
        %736 = vmatpush.bf16.msra.mxu0 %v616
        %737 = vmatpush.bf16.msra.mxu0 %v614
        %738 = vmatpush.bf16.msra.mxu0 %v612
        %739 = vmatpush.bf16.msra.mxu0 %v610
        %740 = vmatpush.bf16.msra.mxu0 %v608
        %741 = vmatpush.bf16.msra.mxu0 %v606
        %742 = vmatpush.bf16.msra.mxu0 %v604
        %743 = vmatpush.bf16.msra.mxu0 %v602
        %744 = vmatmul.bf16.gmra.mxu0 %v444
        %v745 = vpop.f32.mrf.mxu0
        %v746 = vadd.f32 %v717, %v745
        %v747 = vpop.f32.mrf.mxu0
        %v748 = vadd.f32 %v719, %v747
        %749 = vmatmul.bf16.gmra.mxu0 %v446
        %v750 = vpop.f32.mrf.mxu0
        %v751 = vadd.f32 %v722, %v750
        %v752 = vpop.f32.mrf.mxu0
        %v753 = vadd.f32 %v724, %v752
        %754 = vmatmul.bf16.gmra.mxu0 %v448
        %v755 = vpop.f32.mrf.mxu0
        %v756 = vadd.f32 %v727, %v755
        %v757 = vpop.f32.mrf.mxu0
        %v758 = vadd.f32 %v729, %v757
        %759 = vmatmul.bf16.gmra.mxu0 %v450
        %v760 = vpop.f32.mrf.mxu0
        %v761 = vadd.f32 %v732, %v760
        %v762 = vpop.f32.mrf.mxu0
        %v763 = vadd.f32 %v734, %v762
        %764 = vdwg.mxu0
        %v765 = vmax.f32 %v688, 0.0
        %v766 = vmax.f32 %v746, 0.0
        %v767 = vmax.f32 %v690, 0.0
        %v768 = vmax.f32 %v748, 0.0
        %v769 = vmax.f32 %v693, 0.0
        %v770 = vmax.f32 %v751, 0.0
        %v771 = vmax.f32 %v695, 0.0
        %v772 = vmax.f32 %v753, 0.0
        %v773 = vmax.f32 %v698, 0.0
        %v774 = vmax.f32 %v756, 0.0
        %v775 = vmax.f32 %v700, 0.0
        %v776 = vmax.f32 %v758, 0.0
        %v777 = vmax.f32 %v703, 0.0
        %v778 = vmax.f32 %v761, 0.0
        %v779 = vmax.f32 %v705, 0.0
        %v780 = vmax.f32 %v763, 0.0
        %v781 = vpack.c.bf16 %v767, %v765
        %v782 = vpack.c.bf16 %v768, %v766
        %v783 = vpack.c.bf16 %v771, %v769
        %v784 = vpack.c.bf16 %v772, %v770
        %v785 = vpack.c.bf16 %v775, %v773
        %v786 = vpack.c.bf16 %v776, %v774
        %v787 = vpack.c.bf16 %v779, %v777
        %v788 = vpack.c.bf16 %v780, %v778
        %v789 = vld [vmem:[%s5] sm:$0xf]
        %v790 = vld [vmem:[%s5 + $0x4] sm:$0xf]
        %v791 = vld [vmem:[%s5 + $0x8] sm:$0xf]
        %v792 = vld [vmem:[%s5 + $0xc] sm:$0xf]
        %v793 = vld [vmem:[%s5 + $0x10] sm:$0xf]
        %v794 = vld [vmem:[%s5 + $0x14] sm:$0xf]
        %v795 = vld [vmem:[%s5 + $0x18] sm:$0xf]
        %v796 = vld [vmem:[%s5 + $0x1c] sm:$0xf]
        %v797 = vld [vmem:[%s5 + $0x20] sm:$0xf]
        %v798 = vld [vmem:[%s5 + $0x24] sm:$0xf]
        %v799 = vld [vmem:[%s5 + $0x28] sm:$0xf]
        %v800 = vld [vmem:[%s5 + $0x2c] sm:$0xf]
        %v801 = vld [vmem:[%s5 + $0x30] sm:$0xf]
        %v802 = vld [vmem:[%s5 + $0x34] sm:$0xf]
        %v803 = vld [vmem:[%s5 + $0x38] sm:$0xf]
        %v804 = vld [vmem:[%s5 + $0x3c] sm:$0xf]
        %v805 = vld [vmem:[%s5 + $0x40] sm:$0xf]
        %v806 = vld [vmem:[%s5 + $0x44] sm:$0xf]
        %v807 = vld [vmem:[%s5 + $0x48] sm:$0xf]
        %v808 = vld [vmem:[%s5 + $0x4c] sm:$0xf]
        %v809 = vld [vmem:[%s5 + $0x50] sm:$0xf]
        %v810 = vld [vmem:[%s5 + $0x54] sm:$0xf]
        %v811 = vld [vmem:[%s5 + $0x58] sm:$0xf]
        %v812 = vld [vmem:[%s5 + $0x5c] sm:$0xf]
        %v813 = vld [vmem:[%s5 + $0x60] sm:$0xf]
        %v814 = vld [vmem:[%s5 + $0x64] sm:$0xf]
        %v815 = vld [vmem:[%s5 + $0x68] sm:$0xf]
        %v816 = vld [vmem:[%s5 + $0x6c] sm:$0xf]
        %v817 = vld [vmem:[%s5 + $0x70] sm:$0xf]
        %v818 = vld [vmem:[%s5 + $0x74] sm:$0xf]
        %v819 = vld [vmem:[%s5 + $0x78] sm:$0xf]
        %v820 = vld [vmem:[%s5 + $0x7c] sm:$0xf]
        %v821 = vld [vmem:[%s6] sm:$0x1]
        %v823 = vperm.slane %v821, 0
        %v857 = vunpack.c.l.b16 %v789
        %v858 = vunpack.c.l.b16 %v790
        %v859 = vunpack.c.l.b16 %v791
        %v860 = vunpack.c.l.b16 %v792
        %v861 = vunpack.c.l.b16 %v793
        %v862 = vunpack.c.l.b16 %v794
        %v863 = vunpack.c.l.b16 %v795
        %v864 = vunpack.c.l.b16 %v796
        %v865 = vunpack.c.l.b16 %v797
        %v866 = vunpack.c.l.b16 %v798
        %v867 = vunpack.c.l.b16 %v799
        %v868 = vunpack.c.l.b16 %v800
        %v869 = vunpack.c.l.b16 %v801
        %v870 = vunpack.c.l.b16 %v802
        %v871 = vunpack.c.l.b16 %v803
        %v872 = vunpack.c.l.b16 %v804
        %v873 = vunpack.c.l.b16 %v805
        %v874 = vunpack.c.l.b16 %v806
        %v875 = vunpack.c.l.b16 %v807
        %v876 = vunpack.c.l.b16 %v808
        %v877 = vunpack.c.l.b16 %v809
        %v878 = vunpack.c.l.b16 %v810
        %v879 = vunpack.c.l.b16 %v811
        %v880 = vunpack.c.l.b16 %v812
        %v881 = vunpack.c.l.b16 %v813
        %v882 = vunpack.c.l.b16 %v814
        %v883 = vunpack.c.l.b16 %v815
        %v884 = vunpack.c.l.b16 %v816
        %v885 = vunpack.c.l.b16 %v817
        %v886 = vunpack.c.l.b16 %v818
        %v887 = vunpack.c.l.b16 %v819
        %v888 = vunpack.c.l.b16 %v820
        %v889 = vpack.c.b16 %v858, %v857
        %v890 = vpack.c.b16 %v860, %v859
        %v891 = vpack.c.b16 %v862, %v861
        %v892 = vpack.c.b16 %v864, %v863
        %v893 = vpack.c.b16 %v866, %v865
        %v894 = vpack.c.b16 %v868, %v867
        %v895 = vpack.c.b16 %v870, %v869
        %v896 = vpack.c.b16 %v872, %v871
        %v897 = vpack.c.b16 %v874, %v873
        %v898 = vpack.c.b16 %v876, %v875
        %v899 = vpack.c.b16 %v878, %v877
        %v900 = vpack.c.b16 %v880, %v879
        %v901 = vpack.c.b16 %v882, %v881
        %v902 = vpack.c.b16 %v884, %v883
        %v903 = vpack.c.b16 %v886, %v885
        %v904 = vpack.c.b16 %v888, %v887
        %921 = vmatpush.bf16.msra.mxu0 %v896
        %922 = vmatpush.bf16.msra.mxu0 %v895
        %923 = vmatpush.bf16.msra.mxu0 %v894
        %924 = vmatpush.bf16.msra.mxu0 %v893
        %925 = vmatpush.bf16.msra.mxu0 %v892
        %926 = vmatpush.bf16.msra.mxu0 %v891
        %927 = vmatpush.bf16.msra.mxu0 %v890
        %928 = vmatpush.bf16.msra.mxu0 %v889
        %929 = vmatmul.bf16.gmra.mxu0 %v781
        %v930 = vpop.f32.mrf.mxu0
        %v931 = vadd.f32 %v823, %v930
        %v932 = vpop.f32.mrf.mxu0
        %v933 = vadd.f32 %v823, %v932
        %934 = vmatmul.bf16.gmra.mxu0 %v783
        %v935 = vpop.f32.mrf.mxu0
        %v936 = vadd.f32 %v823, %v935
        %v937 = vpop.f32.mrf.mxu0
        %v938 = vadd.f32 %v823, %v937
        %939 = vmatmul.bf16.gmra.mxu0 %v785
        %v940 = vpop.f32.mrf.mxu0
        %v941 = vadd.f32 %v823, %v940
        %v942 = vpop.f32.mrf.mxu0
        %v943 = vadd.f32 %v823, %v942
        %944 = vmatmul.bf16.gmra.mxu0 %v787
        %v945 = vpop.f32.mrf.mxu0
        %v946 = vadd.f32 %v823, %v945
        %v947 = vpop.f32.mrf.mxu0
        %v948 = vadd.f32 %v823, %v947
        %949 = vdwg.mxu0
        %950 = vmatpush.bf16.msra.mxu0 %v904
        %951 = vmatpush.bf16.msra.mxu0 %v903
        %952 = vmatpush.bf16.msra.mxu0 %v902
        %953 = vmatpush.bf16.msra.mxu0 %v901
        %954 = vmatpush.bf16.msra.mxu0 %v900
        %955 = vmatpush.bf16.msra.mxu0 %v899
        %956 = vmatpush.bf16.msra.mxu0 %v898
        %957 = vmatpush.bf16.msra.mxu0 %v897
        %958 = vmatmul.bf16.gmra.mxu0 %v782
        %v959 = vpop.f32.mrf.mxu0
        %v960 = vadd.f32 %v931, %v959
        %v961 = vpop.f32.mrf.mxu0
        %v962 = vadd.f32 %v933, %v961
        %963 = vmatmul.bf16.gmra.mxu0 %v784
        %v964 = vpop.f32.mrf.mxu0
        %v965 = vadd.f32 %v936, %v964
        %v966 = vpop.f32.mrf.mxu0
        %v967 = vadd.f32 %v938, %v966
        %968 = vmatmul.bf16.gmra.mxu0 %v786
        %v969 = vpop.f32.mrf.mxu0
        %v970 = vadd.f32 %v941, %v969
        %v971 = vpop.f32.mrf.mxu0
        %v972 = vadd.f32 %v943, %v971
        %973 = vmatmul.bf16.gmra.mxu0 %v788
        %v974 = vpop.f32.mrf.mxu0
        %v975 = vadd.f32 %v946, %v974
        %v976 = vpop.f32.mrf.mxu0
        %v977 = vadd.f32 %v948, %v976
        %978 = vdwg.mxu0
        %979 = vst [vmem:[%s289] sm:$0xff] %v960
        %980 = vst [vmem:[%s289 + $0x8] sm:$0xff] %v962
        %981 = vst [vmem:[%s289 + $0x10] sm:$0xff] %v965
        %982 = vst [vmem:[%s289 + $0x18] sm:$0xff] %v967
        %983 = vst [vmem:[%s289 + $0x20] sm:$0xff] %v970
        %984 = vst [vmem:[%s289 + $0x28] sm:$0xff] %v972
        %985 = vst [vmem:[%s289 + $0x30] sm:$0xff] %v975
        %986 = vst [vmem:[%s289 + $0x38] sm:$0xff] %v977
        %s987 = sand.u32 %s182, 1
        %s988 = scalar_lea.sflag [#allocation4], %s987
        %s989 = sand.u32 %s182, 1
        %s990 = smul.addr %s989, 64
        %s991 = scalar_lea.vmem [#allocation5], %s990
        // Predicated region
        $region53: #{tpu_custom_call.1} parent=47 // pred_check
          %p992 = pneg %p192
        $region54: #{tpu_custom_call.1} parent=47 // pred_check_branch
          %994 = sbr.rel (%p992) target = $region56
        $region55: #{tpu_custom_call.1} parent=47 // pred_region
          %s995 = smul.u32 8, %s22
          %997 = vsyncadd %s988, 0
          %s998 = smul.addr %s995, 8
          %s999 = scalar_lea.hbm %s7, %s998
          %s1000 = sshll.u32 %s991, 4
          %s1001 = int_to_ptr.vmem [resolvable:$true] %s1000
          %s1002 = sshll.u32 %s999, 4
          %s1003 = int_to_ptr.hbm [resolvable:$true] %s1002
          %1008 = dma.vmem_to_hbm [thread:$0]  %s1001, 1024, %s1003, %s988, 128, 128, 8
        $region56: #{tpu_custom_call.1} parent=47 // pred_fallthru
          _
      $region48: #{tpu_custom_call.1} parent=5 // pred_fallthru
        _
      %p1009 = scmp.le.s32.totalorder 2, %s17
      // Predicated region
      $region57: #{tpu_custom_call.1} parent=5 // pred_check
        %p1010 = pneg %p1009
      $region58: #{tpu_custom_call.1} parent=5 // pred_check_branch
        %1012 = sbr.rel (%p1010) target = $region60
      $region59: #{tpu_custom_call.1} parent=5 // pred_region
        %s1013 = ssub.s32 %s17, 2
        // Predicated region
        $region61: #{tpu_custom_call.1} parent=59 // pred_check
          %p1014 = pneg %p198
        $region62: #{tpu_custom_call.1} parent=59 // pred_check_branch
          %1016 = sbr.rel (%p1014) target = $region64
        $region63: #{tpu_custom_call.1} parent=59 // pred_region
          %s1017 = sand.u32 %s183, 1
          %s1018 = scalar_lea.sflag [#allocation4], %s1017
          %s1019 = sand.u32 %s183, 1
          %s1020 = smul.addr %s1019, 64
          %s1021 = scalar_lea.vmem [#allocation5], %s1020
          %1023 = dma.done %s1018, 1024
        $region64: #{tpu_custom_call.1} parent=59 // pred_fallthru
          _
      $region60: #{tpu_custom_call.1} parent=5 // pred_fallthru
        _
    $region6: #{tpu_custom_call.1} parent=1 // loop_footer
      %s21 = sadd.s32 1, %s17
    $region7: #{tpu_custom_call.1} parent=1 // loop_footer_branch
      %16 = sbr.rel target = $region3
    $region8: #{tpu_custom_call.1} parent=1 // loop_exit
      _
    %1024 = vsyncpa [#allocation3], 1
    %s1025 = scalar_lea.sflag [#allocation3], 1
    %1026 = vsyncpa %s1025, 1
    %1027 = vsyncpa [#allocation4], 1
    %s1028 = scalar_lea.sflag [#allocation4], 1
    %1029 = vsyncpa %s1028, 1

</llo_original>
